<compile_context>
chip_gen: v6e
topology: v6e:2x2x1
jax: 0.10.0
libtpu: 0.0.40
codegen_flags: <defaults>
</compile_context>

<pallas_src>
import jax
import jax.numpy as jnp
from jax import lax
from jax.experimental import pallas as pl
from jax.experimental.pallas import tpu as pltpu


def _round_up(x, m):
    return (x + m - 1) // m * m


def _downsampler_kernel(w_ref, p_ref, b_ref, out_ref):
    """One fused conv-as-GEMM tile + BN shift + ReLU.

    w_ref:   (Cout_pad, K_pad)  bf16, BN scale folded into weights; resident across grid
    p_ref:   (K_pad, S_tile)    bf16 im2col patches, K on sublanes / spatial on lanes
    b_ref:   (Cout_pad, 1)      f32 BN shift; resident across grid
    out_ref: (Cout_pad, S_tile) f32, lane-dense output tile
    """
    y = lax.dot_general(
        w_ref[...], p_ref[...],
        dimension_numbers=(((1,), (0,)), ((), ())),   # canonical (Cout,K) x (K,S) MXU feed
        preferred_element_type=jnp.float32)
    out_ref[...] = jnp.maximum(y + b_ref[...], 0.0)


def downsampler_a(x_nchw, w_hwio, bn_shift, *, s_tile_max=2048):
    """DownSamplerA forward.

    x_nchw:   (N, Cin, H, W) float32 (PyTorch layout)
    w_hwio:   (3, 3, Cin, Cout) conv weights with the BN scale already folded in
    bn_shift: (Cout,) BN shift (beta - mean * scale)
    returns   (N, Cout, Ho, Wo) float32 with Ho = (H-1)//2 + 1, Wo = (W-1)//2 + 1
    """
    x = x_nchw.astype(jnp.float32)
    n, cin, h, w = x.shape
    cout = w_hwio.shape[-1]
    ho = (h - 1) // 2 + 1
    wo = (w - 1) // 2 + 1

    # ---- host-side im2col into a dense (K, S) layout, K ordered (dy, dx, c) --------------
    x_nhwc = jnp.transpose(x, (0, 2, 3, 1))
    xpad = jnp.pad(x_nhwc, ((0, 0), (1, 1), (1, 1), (0, 0)))        # (N, H+2, W+2, Cin)
    taps = [xpad[:, dy:dy + 2 * ho - 1:2, dx:dx + 2 * wo - 1:2, :]  # stride-2 tap (dy, dx)
            for dy in range(3) for dx in range(3)]                  # 9 x (N, Ho, Wo, Cin)
    patches = jnp.stack(taps, axis=3)                               # (N, Ho, Wo, 9, Cin)
    patches = patches.reshape(n, ho * wo, 9 * cin)
    patches = jnp.transpose(patches, (0, 2, 1))                     # (N, 9*Cin, Ho*Wo)

    # ---- pad to MXU / vreg friendly extents ----------------------------------------------
    k = 9 * cin
    s = ho * wo
    k_pad = _round_up(k, 16)           # sublane-aligned contraction (bf16 packs in pairs)
    cout_pad = _round_up(cout, 8)
    s_pad = _round_up(s, 128)          # lane-dense output -> unmasked vector stores
    s_tile = 128
    for cand in (2048, 1024, 512, 256, 128):
        if cand <= s_tile_max and s_pad % cand == 0:
            s_tile = cand
            break

    patches = jnp.pad(patches, ((0, 0), (0, k_pad - k), (0, s_pad - s))).astype(jnp.bfloat16)
    w2d = jnp.transpose(w_hwio, (3, 0, 1, 2)).reshape(cout, k).astype(jnp.float32)
    w2d = jnp.pad(w2d, ((0, cout_pad - cout), (0, k_pad - k))).astype(jnp.bfloat16)
    bias = jnp.pad(bn_shift.astype(jnp.float32), (0, cout_pad - cout)).reshape(cout_pad, 1)

    grid = (n, s_pad // s_tile)
    out = pl.pallas_call(
        _downsampler_kernel,
        out_shape=jax.ShapeDtypeStruct((n, cout_pad, s_pad), jnp.float32),
        grid=grid,
        in_specs=[
            pl.BlockSpec((cout_pad, k_pad), lambda ni, si: (0, 0)),          # resident
            pl.BlockSpec((None, k_pad, s_tile), lambda ni, si: (ni, 0, si)),  # per-tile
            pl.BlockSpec((cout_pad, 1), lambda ni, si: (0, 0)),              # resident
        ],
        out_specs=pl.BlockSpec((None, cout_pad, s_tile), lambda ni, si: (ni, 0, si)),
        compiler_params=pltpu.CompilerParams(
            dimension_semantics=("parallel", "parallel")),
    )(w2d, patches, bias)

    return out[:, :cout, :s].reshape(n, cout, ho, wo)                 # NCHW, no transpose


def init_params(key, n_in, n_out, eps=1e-3):
    """Deterministic synthetic parameters; BN (inference) folded to scale/shift."""
    ks = jax.random.split(key, 5)
    w = jax.random.normal(ks[0], (3, 3, n_in, n_out), jnp.float32) * 0.1   # HWIO
    gamma = 1.0 + 0.1 * jax.random.normal(ks[1], (n_out,), jnp.float32)
    beta = 0.1 * jax.random.normal(ks[2], (n_out,), jnp.float32)
    mean = 0.1 * jax.random.normal(ks[3], (n_out,), jnp.float32)
    var = jax.random.uniform(ks[4], (n_out,), jnp.float32, minval=0.5, maxval=1.5)
    scale = gamma / jnp.sqrt(var + eps)
    shift = beta - mean * scale
    return w * scale[None, None, None, :], shift


def reference_forward(x_nchw, w_hwio, bn_shift):
    """Pure-JAX reference (lax.conv, stride 2, pad 1) for correctness checking."""
    x = jnp.transpose(x_nchw, (0, 2, 3, 1)).astype(jnp.float32)
    dn = lax.conv_dimension_numbers(x.shape, w_hwio.shape, ("NHWC", "HWIO", "NHWC"))
    y = lax.conv_general_dilated(x, w_hwio, window_strides=(2, 2),
                                 padding=[(1, 1), (1, 1)], dimension_numbers=dn)
    y = jnp.maximum(y + bn_shift[None, None, None, :], 0.0)
    return jnp.transpose(y, (0, 3, 1, 2))


if __name__ == "__main__":
    key = jax.random.PRNGKey(0)
    kx, kp = jax.random.split(key)

    N, C_IN, H, W = 2, 4, 16, 16
    C_OUT = 8
    x = jax.random.normal(kx, (N, C_IN, H, W), jnp.float32)
    w_hwio, bn_shift = init_params(kp, C_IN, C_OUT)

    out = jax.block_until_ready(downsampler_a(x, w_hwio, bn_shift))
    ref = reference_forward(x, w_hwio, bn_shift)

    assert out.shape == (N, C_OUT, H // 2, W // 2)
    # bf16 matmul operands (f32 accumulation) -> loosened tolerance vs the f32 reference.
    assert jnp.allclose(out, ref, atol=3e-2, rtol=3e-2), "mismatch vs JAX reference"
    print("KERNEL_OK")
</pallas_src>

<mosaic_0001>
module attributes {stable_mosaic.version = 11 : i64} {
  func.func @_downsampler_kernel(%arg0: i32, %arg1: i32, %arg2: memref<8x48xbf16, #tpu.memory_space<vmem>>, %arg3: memref<1x48x128xbf16, #tpu.memory_space<vmem>>, %arg4: memref<8x1xf32, #tpu.memory_space<vmem>>, %arg5: memref<1x8x128xf32, #tpu.memory_space<vmem>>) attributes {dimension_semantics = [#tpu.dimension_semantics<parallel>, #tpu.dimension_semantics<parallel>], iteration_bounds = array<i64: 2, 1>, scalar_prefetch = 0 : i64, scratch_operands = 0 : i64, tpu.core_type = #tpu.core_type<tc>, window_params = [{pipeline_mode = #tpu.pipeline_mode<synchronous>, transform_indices = @transform_0, window_bounds = array<i64: 8, 48>}, {transform_indices = @transform_1, window_bounds = array<i64: 1, 48, 128>}, {pipeline_mode = #tpu.pipeline_mode<synchronous>, transform_indices = @transform_2, window_bounds = array<i64: 8, 1>}, {transform_indices = @transform_3, window_bounds = array<i64: 1, 8, 128>}]} {
    %c0 = arith.constant 0 : index
    %c0_0 = arith.constant 0 : index
    %0 = vector.load %arg2[%c0, %c0_0] : memref<8x48xbf16, #tpu.memory_space<vmem>>, vector<8x48xbf16>
    %c0_1 = arith.constant 0 : index
    %c0_2 = arith.constant 0 : index
    %c0_3 = arith.constant 0 : index
    %1 = vector.load %arg3[%c0_1, %c0_2, %c0_3] : memref<1x48x128xbf16, #tpu.memory_space<vmem>>, vector<1x48x128xbf16>
    %2 = vector.shape_cast %1 : vector<1x48x128xbf16> to vector<48x128xbf16>
    %cst = arith.constant dense<0.000000e+00> : vector<8x128xf32>
    %3 = tpu.matmul %0, %2, %cst {dimension_numbers = #tpu.dot_dimension_numbers<[1], [0], [0], [1], [0, 0, 1, 1], [], []>} : vector<8x48xbf16>, vector<48x128xbf16>, vector<8x128xf32> -> vector<8x128xf32>
    %c0_4 = arith.constant 0 : index
    %c0_5 = arith.constant 0 : index
    %4 = vector.load %arg4[%c0_4, %c0_5] : memref<8x1xf32, #tpu.memory_space<vmem>>, vector<8x1xf32>
    %5 = vector.broadcast %4 : vector<8x1xf32> to vector<8x128xf32>
    %6 = arith.addf %3, %5 : vector<8x128xf32>
    %cst_6 = arith.constant 0.000000e+00 : f32
    %7 = vector.broadcast %cst_6 : f32 to vector<8x128xf32>
    %8 = arith.maximumf %6, %7 : vector<8x128xf32>
    %c0_7 = arith.constant 0 : index
    %c0_8 = arith.constant 0 : index
    %c0_9 = arith.constant 0 : index
    %9 = vector.load %arg5[%c0_7, %c0_8, %c0_9] : memref<1x8x128xf32, #tpu.memory_space<vmem>>, vector<1x8x128xf32>
    %10 = vector.shape_cast %9 : vector<1x8x128xf32> to vector<8x128xf32>
    %11 = vector.shape_cast %8 : vector<8x128xf32> to vector<1x8x128xf32>
    tpu.vector_store %arg5[%c0_7, %c0_8, %c0_9], %11 {strides = array<i32>} : memref<1x8x128xf32, #tpu.memory_space<vmem>>, vector<1x8x128xf32>,
    return
  }
  func.func @transform_0(%arg0: i32, %arg1: i32) -> (i32, i32) {
    %c0_i32 = arith.constant 0 : i32
    %c0_i32_0 = arith.constant 0 : i32
    %c0_i32_1 = arith.constant 0 : i32
    return %c0_i32, %c0_i32_0 : i32, i32
  }
  func.func @transform_1(%arg0: i32, %arg1: i32) -> (i32, i32, i32) {
    %c0_i32 = arith.constant 0 : i32
    %c0_i32_0 = arith.constant 0 : i32
    return %arg0, %c0_i32, %arg1 : i32, i32, i32
  }
  func.func @transform_2(%arg0: i32, %arg1: i32) -> (i32, i32) {
    %c0_i32 = arith.constant 0 : i32
    %c0_i32_0 = arith.constant 0 : i32
    %c0_i32_1 = arith.constant 0 : i32
    return %c0_i32, %c0_i32_0 : i32, i32
  }
  func.func @transform_3(%arg0: i32, %arg1: i32) -> (i32, i32, i32) {
    %c0_i32 = arith.constant 0 : i32
    %c0_i32_0 = arith.constant 0 : i32
    return %arg0, %c0_i32, %arg1 : i32, i32, i32
  }
}

</mosaic_0001>

<llo_original>
// kernel: tpu_custom_call.1
$region0: #{tpu_custom_call.1}
  #allocation0 [shape = 'u32[]', space=smem, size = 0x4, offset = 0x4, fixed_abs, tag = 'smem constant byte address 0x4 - core index']
  #allocation1 [shape = 'u32[144,128]{1,0:T(1,128)}', space=vmem, size = 0x12000, scoped, tag = 'internal scratch']
  %s0 = inlined_call_operand.vmem [shape: bf16[8,48], index: 0, kind: input, shape index: {}]
  %s1 = inlined_call_operand.hbm [shape: bf16[2,48,128], index: 1, kind: input, shape index: {}]
  %s2 = inlined_call_operand.vmem [shape: f32[8,1], index: 2, kind: input, shape index: {}]
  %s3 = inlined_call_operand.hbm [shape: f32[2,8,128], index: 3, kind: output, shape index: {}]
  %s4 = sld [smem:[#allocation0]]
  $region49: #{tpu_custom_call.1} parent=0
    _
  %s6 = ssub.s32 1, %s4
  %s7 = scalar_select 0, %s6, %s4
  $region1: #{tpu_custom_call.1} parent=0
    #allocation2 [shape = 'u8[24576]{0}', space=vmem, size = 0x6000, scoped, tag = 'input window, operand 1']
    #allocation3 [shape = 's32[2]{0}', space=sflag, size = 0x8, scoped, tag = 'scoped memory for tpu_custom_call.1']
    #allocation4 [shape = 's32[2]{0}', space=sflag, size = 0x8, scoped, tag = 'scoped memory for tpu_custom_call.1']
    #allocation5 [shape = 'u8[8192]{0}', space=vmem, size = 0x2000, scoped, tag = 'output window, operand 0']
    %8 = vsyncpa [#allocation3], 0
    %s9 = scalar_lea.sflag [#allocation3], 1
    %10 = vsyncpa %s9, 0
    %11 = vsyncpa [#allocation4], 0
    %s12 = scalar_lea.sflag [#allocation4], 1
    %13 = vsyncpa %s12, 0
    loop: start=0, step=1, limit=4
    $region2: #{tpu_custom_call.1} parent=1 // loop_pre_header
      _
    $region3: #{tpu_custom_call.1} parent=1 // loop_header
      %s15 = sphi 0, %s19
      %p16 = scmp.ge.s32.totalorder %s15, 4
      %s22 = sphi 0, %s34
      %s23 = sphi 0, %s30
      %s24 = sphi 0, %s22
      %s25 = sphi 0, %s23
      %s26 = sphi 0, %s24
      %s27 = sphi 0, %s25
      %s35 = sphi 0, %s35
      %s37 = sphi 0, %s35
      %s38 = sphi 0, %s37
      %s52 = sphi 0, %s38
      %s60 = sphi 0, %s62
      %s63 = sphi 0, %s60
      %s64 = sphi 0, %s63
      %s80 = sphi 0, %s64
      %s84 = sphi 0, %s84
      %s86 = sphi 0, %s84
      %s87 = sphi 0, %s86
      %s101 = sphi 0, %s87
      %s109 = sphi 0, %s111
      %s112 = sphi 0, %s109
      %s113 = sphi 0, %s112
      %s129 = sphi 0, %s113
    $region4: #{tpu_custom_call.1} parent=1 // loop_header_branch
      %18 = sbr.rel (%p16) target = $region8
    $region5: #{tpu_custom_call.1} parent=1 // loop_body
      %s20 = ssub.s32 %s15, 1
      %s21 = ssub.s32 %s15, 2
      %s28 = sadd.s32 1, %s23
      %p29 = scmp.ge.s32.totalorder %s28, 1
      %s30 = scalar_select %p29, 0, %s28
      %s31 = sadd.s32 1, %s22
      %s32 = scalar_select %p29, %s31, %s22
      %p33 = scmp.ge.s32.totalorder %s32, 2
      %s34 = scalar_select %p33, 0, %s32
      %s36 = sadd.s32 %s35, 1
      %p39 = scmp.eq.s32.totalorder %s15, 1
      %p40 = scmp.ne.s32.totalorder %s35, %s37
      %p41 = scmp.eq.s32.totalorder %s15, 0
      %p42 = por %p40, %p41
      %p43 = scmp.ne.s32.totalorder %s35, %s37
      %p44 = scmp.eq.s32.totalorder %s20, 1
      %p45 = por %p43, %p44
      %p46 = scmp.ne.s32.totalorder %s37, %s38
      %p47 = scmp.eq.s32.totalorder %s20, 0
      %p48 = por %p46, %p47
      %p49 = scmp.ne.s32.totalorder %s37, %s38
      %p50 = scmp.eq.s32.totalorder %s21, 1
      %p51 = por %p49, %p50
      %p53 = scmp.ne.s32.totalorder %s38, %s52
      %p54 = scmp.eq.s32.totalorder %s21, 0
      %p55 = por %p53, %p54
      %s56 = ssub.s32 %s22, %s34
      %s57 = ssub.s32 %s23, %s30
      %s58 = sor.u32 %s56, %s57
      %p59 = scmp.eq.s32.totalorder %s58, 0
      %s61 = sadd.s32 %s60, 1
      %s62 = scalar_select %p59, %s60, %s61
      %p65 = pneg %p59
      %p66 = scmp.eq.s32.totalorder %s15, 1
      %p67 = por %p65, %p66
      %p68 = scmp.ne.s32.totalorder %s60, %s63
      %p69 = scmp.eq.s32.totalorder %s15, 0
      %p70 = por %p68, %p69
      %p71 = scmp.ne.s32.totalorder %s60, %s63
      %p72 = scmp.eq.s32.totalorder %s20, 1
      %p73 = por %p71, %p72
      %p74 = scmp.ne.s32.totalorder %s63, %s64
      %p75 = scmp.eq.s32.totalorder %s20, 0
      %p76 = por %p74, %p75
      %p77 = scmp.ne.s32.totalorder %s63, %s64
      %p78 = scmp.eq.s32.totalorder %s21, 1
      %p79 = por %p77, %p78
      %p81 = scmp.ne.s32.totalorder %s64, %s80
      %p82 = scmp.eq.s32.totalorder %s21, 0
      %p83 = por %p81, %p82
      %s85 = sadd.s32 %s84, 1
      %p88 = scmp.eq.s32.totalorder %s15, 1
      %p89 = scmp.ne.s32.totalorder %s84, %s86
      %p90 = scmp.eq.s32.totalorder %s15, 0
      %p91 = por %p89, %p90
      %p92 = scmp.ne.s32.totalorder %s84, %s86
      %p93 = scmp.eq.s32.totalorder %s20, 1
      %p94 = por %p92, %p93
      %p95 = scmp.ne.s32.totalorder %s86, %s87
      %p96 = scmp.eq.s32.totalorder %s20, 0
      %p97 = por %p95, %p96
      %p98 = scmp.ne.s32.totalorder %s86, %s87
      %p99 = scmp.eq.s32.totalorder %s21, 1
      %p100 = por %p98, %p99
      %p102 = scmp.ne.s32.totalorder %s87, %s101
      %p103 = scmp.eq.s32.totalorder %s21, 0
      %p104 = por %p102, %p103
      %s105 = ssub.s32 %s22, %s34
      %s106 = ssub.s32 %s23, %s30
      %s107 = sor.u32 %s105, %s106
      %p108 = scmp.eq.s32.totalorder %s107, 0
      %s110 = sadd.s32 %s109, 1
      %s111 = scalar_select %p108, %s109, %s110
      %p114 = pneg %p108
      %p115 = scmp.eq.s32.totalorder %s15, 1
      %p116 = por %p114, %p115
      %p117 = scmp.ne.s32.totalorder %s109, %s112
      %p118 = scmp.eq.s32.totalorder %s15, 0
      %p119 = por %p117, %p118
      %p120 = scmp.ne.s32.totalorder %s109, %s112
      %p121 = scmp.eq.s32.totalorder %s20, 1
      %p122 = por %p120, %p121
      %p123 = scmp.ne.s32.totalorder %s112, %s113
      %p124 = scmp.eq.s32.totalorder %s20, 0
      %p125 = por %p123, %p124
      %p126 = scmp.ne.s32.totalorder %s112, %s113
      %p127 = scmp.eq.s32.totalorder %s21, 1
      %p128 = por %p126, %p127
      %p130 = scmp.ne.s32.totalorder %s113, %s129
      %p131 = scmp.eq.s32.totalorder %s21, 0
      %p132 = por %p130, %p131
      %p133 = scmp.le.s32.totalorder 1, %s15
      %p134 = scmp.lt.s32.totalorder %s15, 3
      %p135 = pnand %p133, %p134
      %p136 = pneg %p135
      // Predicated region
      $region9: #{tpu_custom_call.1} parent=5 // pred_check
        _
      $region10: #{tpu_custom_call.1} parent=5 // pred_check_branch
        %138 = sbr.rel (%p135) target = $region12
      $region11: #{tpu_custom_call.1} parent=5 // pred_region
        %s139 = ssub.s32 %s15, 1
        // Predicated region
        $region13: #{tpu_custom_call.1} parent=11 // pred_check
          %p140 = pneg %p48
        $region14: #{tpu_custom_call.1} parent=11 // pred_check_branch
          %142 = sbr.rel (%p140) target = $region16
        $region15: #{tpu_custom_call.1} parent=11 // pred_region
          _
        $region16: #{tpu_custom_call.1} parent=11 // pred_fallthru
          _
        // Predicated region
        $region17: #{tpu_custom_call.1} parent=11 // pred_check
          %p143 = pneg %p97
        $region18: #{tpu_custom_call.1} parent=11 // pred_check_branch
          %145 = sbr.rel (%p143) target = $region20
        $region19: #{tpu_custom_call.1} parent=11 // pred_region
          _
        $region20: #{tpu_custom_call.1} parent=11 // pred_fallthru
          _
      $region12: #{tpu_custom_call.1} parent=5 // pred_fallthru
        _
      %p146 = scmp.lt.s32.totalorder %s15, 2
      // Predicated region
      $region21: #{tpu_custom_call.1} parent=5 // pred_check
        %p147 = pneg %p146
      $region22: #{tpu_custom_call.1} parent=5 // pred_check_branch
        %149 = sbr.rel (%p147) target = $region24
      $region23: #{tpu_custom_call.1} parent=5 // pred_region
        // Predicated region
        $region25: #{tpu_custom_call.1} parent=23 // pred_check
          %p150 = pneg %p70
        $region26: #{tpu_custom_call.1} parent=23 // pred_check_branch
          %152 = sbr.rel (%p150) target = $region28
        $region27: #{tpu_custom_call.1} parent=23 // pred_region
          %s153 = sand.u32 %s60, 1
          %s154 = scalar_lea.sflag [#allocation3], %s153
          %s155 = sand.u32 %s60, 1
          %s156 = smul.addr %s155, 24
          %s157 = scalar_lea.vmem [#allocation2], %s156
          %s159 = ssub.s32 384, 384
          %160 = vsyncadd %s154, %s159
          %s161 = smul.addr %s22, 6
          %s162 = sadd.s32 %s23, %s161
          %s163 = smul.addr %s162, 64
          %s164 = scalar_lea.hbm %s1, %s163
          %s165 = sshll.u32 %s157, 4
          %s166 = int_to_ptr.vmem [resolvable:$true] %s165
          %171 = dma.hbm_to_vmem [thread:$0]  %s164, 384, %s166, %s154, 64, 64, 4
        $region28: #{tpu_custom_call.1} parent=23 // pred_fallthru
          _
      $region24: #{tpu_custom_call.1} parent=5 // pred_fallthru
        _
      %p172 = scmp.le.s32.totalorder 1, %s15
      %p173 = scmp.lt.s32.totalorder %s15, 3
      %p174 = pnand %p172, %p173
      %p175 = pneg %p174
      // Predicated region
      $region29: #{tpu_custom_call.1} parent=5 // pred_check
        _
      $region30: #{tpu_custom_call.1} parent=5 // pred_check_branch
        %177 = sbr.rel (%p174) target = $region32
      $region31: #{tpu_custom_call.1} parent=5 // pred_region
        %s178 = ssub.s32 %s15, 1
        %s179 = sand.u32 %s63, 1
        %s180 = scalar_lea.sflag [#allocation3], %s179
        %s181 = sand.u32 %s63, 1
        %s182 = smul.addr %s181, 24
        %s183 = scalar_lea.vmem [#allocation2], %s182
        // Predicated region
        $region33: #{tpu_custom_call.1} parent=31 // pred_check
          %p184 = pneg %p76
        $region34: #{tpu_custom_call.1} parent=31 // pred_check_branch
          %186 = sbr.rel (%p184) target = $region36
        $region35: #{tpu_custom_call.1} parent=31 // pred_region
          %187 = dma.done %s180, 384
        $region36: #{tpu_custom_call.1} parent=31 // pred_fallthru
          _
        %p188 = pneg %p48
        %p189 = pneg %p45
        %s190 = sand.u32 %s63, 1
        %s191 = scalar_lea.sflag [#allocation3], %s190
        %s192 = sand.u32 %s63, 1
        %s193 = smul.addr %s192, 24
        %s194 = scalar_lea.vmem [#allocation2], %s193
        %p195 = pneg %p76
        %p196 = pneg %p73
        %p197 = pneg %p97
        %p198 = pneg %p94
        %p199 = pneg %p125
        %p200 = pneg %p122
        %s201 = sand.u32 %s112, 1
        %s202 = scalar_lea.sflag [#allocation4], %s201
        %s203 = sand.u32 %s112, 1
        %s204 = smul.addr %s203, 8
        %s205 = scalar_lea.vmem [#allocation5], %s204
        %v207 = vld [vmem:[%s0] sm:$0xf]
        %v208 = vld [vmem:[%s183] sm:$0xf]
        %v209 = vld [vmem:[%s183 + $0x4] sm:$0xf]
        %v210 = vld [vmem:[%s183 + $0x8] sm:$0xf]
        %v211 = vld [vmem:[%s183 + $0xc] sm:$0xf]
        %v212 = vld [vmem:[%s183 + $0x10] sm:$0xf]
        %v213 = vld [vmem:[%s183 + $0x14] sm:$0xf]
        %v214 = vld [vmem:[%s2] sm:$0xff]
        %216 = vset.pattern.permute.xlu0 0
        %217 = vperm.xlu0 %216, %v214
        %v218 = vpop.permute.xlu0 %217
        %v226 = vunpack.c.l.b16 %v208
        %v227 = vunpack.c.l.b16 %v209
        %v228 = vunpack.c.l.b16 %v210
        %v229 = vunpack.c.l.b16 %v211
        %v230 = vunpack.c.l.b16 %v212
        %v231 = vunpack.c.l.b16 %v213
        %v232 = vpack.c.b16 %v227, %v226
        %v233 = vpack.c.b16 %v229, %v228
        %v234 = vpack.c.b16 %v231, %v230
        %vm238 = vcmask 392192
        %v240 = vsel %vm238, %v207, 0
        %242 = vmatprep.subr.bf16.mxu0 0
        %243 = vmatpush1.bf16.msra.mxu0 0
        %244 = vmatprep.subr.bf16.mxu0 0
        %245 = vmatpush1.bf16.msra.mxu0 0
        %246 = vmatprep.subr.bf16.mxu0 0
        %247 = vmatpush1.bf16.msra.mxu0 0
        %248 = vmatprep.subr.bf16.mxu0 0
        %249 = vmatpush1.bf16.msra.mxu0 0
        %250 = vmatprep.subr.bf16.mxu0 0
        %251 = vmatpush1.bf16.msra.mxu0 0
        %252 = vmatprep.subr.bf16.mxu0 0
        %253 = vmatpush1.bf16.msra.mxu0 %v234
        %254 = vmatprep.subr.bf16.mxu0 0
        %255 = vmatpush1.bf16.msra.mxu0 %v233
        %256 = vmatprep.subr.bf16.mxu0 0
        %257 = vmatpush1.bf16.msra.mxu0 %v232
        %258 = vmatprep.subr.bf16.mxu0 0
        %259 = vmatpush2.bf16.msra.mxu0 0
        %260 = vmatprep.subr.bf16.mxu0 0
        %261 = vmatpush2.bf16.msra.mxu0 0
        %262 = vmatprep.subr.bf16.mxu0 0
        %263 = vmatpush2.bf16.msra.mxu0 0
        %264 = vmatprep.subr.bf16.mxu0 0
        %265 = vmatpush2.bf16.msra.mxu0 0
        %266 = vmatprep.subr.bf16.mxu0 0
        %267 = vmatpush2.bf16.msra.mxu0 0
        %268 = vmatprep.subr.bf16.mxu0 0
        %269 = vmatpush2.bf16.msra.mxu0 0
        %270 = vmatprep.subr.bf16.mxu0 0
        %271 = vmatpush2.bf16.msra.mxu0 0
        %272 = vmatprep.subr.bf16.mxu0 0
        %273 = vmatpush2.bf16.msra.mxu0 0
        %274 = vmatprep.mubr.bf16.mxu0 0
        %275 = vmatmul.mubr.bf16.gmra.mxu0 %v240
        %v276 = vpop.f32.mrf.mxu0
        %v277 = vadd.f32 %v218, %v276
        %v278 = vpop.f32.mrf.mxu0
        %v279 = vpop.f32.mrf.mxu0
        %v280 = vpop.f32.mrf.mxu0
        %281 = vdwg.mxu0
        %v282 = vmax.f32 %v277, 0.0
        %283 = vst [vmem:[%s205] sm:$0xff] %v282
        %s284 = sand.u32 %s112, 1
        %s285 = scalar_lea.sflag [#allocation4], %s284
        %s286 = sand.u32 %s112, 1
        %s287 = smul.addr %s286, 8
        %s288 = scalar_lea.vmem [#allocation5], %s287
        // Predicated region
        $region37: #{tpu_custom_call.1} parent=31 // pred_check
          %p289 = pneg %p122
        $region38: #{tpu_custom_call.1} parent=31 // pred_check_branch
          %291 = sbr.rel (%p289) target = $region40
        $region39: #{tpu_custom_call.1} parent=31 // pred_region
          %s293 = ssub.s32 128, 128
          %294 = vsyncadd %s285, %s293
          %s295 = sadd.s32 %s25, %s24
          %s296 = smul.addr %s295, 128
          %s297 = scalar_lea.hbm %s3, %s296
          %s299 = sshll.u32 %s288, 4
          %s300 = int_to_ptr.vmem [resolvable:$true] %s299
          %302 = dma.vmem_to_hbm [thread:$0]  %s300, 128, %s297, %s285
        $region40: #{tpu_custom_call.1} parent=31 // pred_fallthru
          _
      $region32: #{tpu_custom_call.1} parent=5 // pred_fallthru
        _
      %p303 = scmp.le.s32.totalorder 2, %s15
      // Predicated region
      $region41: #{tpu_custom_call.1} parent=5 // pred_check
        %p304 = pneg %p303
      $region42: #{tpu_custom_call.1} parent=5 // pred_check_branch
        %306 = sbr.rel (%p304) target = $region44
      $region43: #{tpu_custom_call.1} parent=5 // pred_region
        %s307 = ssub.s32 %s15, 2
        // Predicated region
        $region45: #{tpu_custom_call.1} parent=43 // pred_check
          %p308 = pneg %p128
        $region46: #{tpu_custom_call.1} parent=43 // pred_check_branch
          %310 = sbr.rel (%p308) target = $region48
        $region47: #{tpu_custom_call.1} parent=43 // pred_region
          %s311 = sand.u32 %s113, 1
          %s312 = scalar_lea.sflag [#allocation4], %s311
          %s313 = sand.u32 %s113, 1
          %s314 = smul.addr %s313, 8
          %s315 = scalar_lea.vmem [#allocation5], %s314
          %316 = dma.done %s312, 128
        $region48: #{tpu_custom_call.1} parent=43 // pred_fallthru
          _
      $region44: #{tpu_custom_call.1} parent=5 // pred_fallthru
        _
    $region6: #{tpu_custom_call.1} parent=1 // loop_footer
      %s19 = sadd.s32 1, %s15
    $region7: #{tpu_custom_call.1} parent=1 // loop_footer_branch
      %14 = sbr.rel target = $region3
    $region8: #{tpu_custom_call.1} parent=1 // loop_exit
      _
    %317 = vsyncpa [#allocation3], 1
    %s318 = scalar_lea.sflag [#allocation3], 1
    %319 = vsyncpa %s318, 1
    %320 = vsyncpa [#allocation4], 1
    %s321 = scalar_lea.sflag [#allocation4], 1
    %322 = vsyncpa %s321, 1

</llo_original>
